<compile_context>
chip_gen: v7x
topology: tpu7x:2x2x1
jax: 0.10.0
libtpu: 0.0.40
codegen_flags: <defaults>
</compile_context>

<pallas_src>
import functools

import jax
import jax.numpy as jnp
from jax.experimental import pallas as pl
from jax.experimental.pallas import tpu as pltpu


def mil_attention_kernel(x_ref, w1_ref, b1_ref, w2_ref, b2_ref, out_ref):
    tb, n, d = x_ref.shape

    x = x_ref[...]                                   # (TB, N, D), stream dtype
    x2d = x.reshape(tb * n, d)                       # all TB bags in one MXU pass
                                                     # (layout-free when D%128==0, N%8==0)

    # Hidden projection + tanh: MXU matmul with f32 accumulation, tanh on EUP (f32).
    h = jnp.tanh(
        jnp.dot(x2d, w1_ref[...], preferred_element_type=jnp.float32)
        + b1_ref[...].astype(jnp.float32)            # (1, H) broadcast over rows
    )                                                # (TB*N, H) f32

    # Attention logits via a tiny (H -> 1) MXU matmul.  The MXU is idle here and
    # this keeps the instance axis N on sublanes (no lane<->sublane relayout).
    s = jnp.dot(h, w2_ref[...].astype(jnp.float32),
                preferred_element_type=jnp.float32) + b2_ref[0, 0]   # (TB*N, 1)
    s = s.reshape(tb, n, 1)                          # N on the sublane axis

    # Per-bag softmax over the instance (sublane) axis; EUP exp + approx reciprocal.
    s = s - jnp.max(s, axis=1, keepdims=True)
    e = jnp.exp(s)
    a = e * pl.reciprocal(jnp.sum(e, axis=1, keepdims=True), approx=True)  # (TB, N, 1)

    # Weighted instance sum per bag: lane-splat multiply + sublane reduce (f32).
    m = jnp.sum(a * x.astype(jnp.float32), axis=1)   # (TB, D) f32
    out_ref[...] = m.astype(out_ref.dtype)


def _tpu_vmem_and_cores():
    """(physical VMEM bytes, # TensorCores sharing the grid) for the current chip."""
    vmem = None
    try:
        info = pltpu.get_tpu_info()
        vmem = getattr(info, "vmem_capacity_bytes", None)
    except Exception:
        vmem = None
    if not vmem:
        vmem = 64 << 20  # conservative fallback: v7x physical; v5e/v6e have 128 MiB
    cores = 1
    try:
        kind = jax.devices()[0].device_kind.lower()
        if "v7" in kind or "7x" in kind:
            cores = 2    # v7x: 2 TensorCores per chip share "parallel" grid axes
    except Exception:
        pass
    return int(vmem), cores


def _block_vmem_bytes(tb, n, d, h_dim, x_isz, out_isz):
    # Conservative per-block accounting:
    #   x double buffer, an f32-sized temp of the x block (flatten copy / a*x
    #   product), h + logit-path f32 intermediates, out double buffer, softmax temps.
    return (2 * tb * n * d * x_isz
            + 2 * tb * n * d * 4
            + 2 * tb * n * h_dim * 4
            + 2 * tb * d * out_isz
            + 8 * tb * n)


def _fixed_vmem_bytes(d, h_dim, w_isz):
    # Resident weights (double-buffered) + slack.
    return 2 * d * h_dim * w_isz + 8 * h_dim * 4 + (1 << 16)


def _pick_block_b(batch, n, d, h_dim, x_isz, out_isz, w_isz, vmem_bytes, num_tc):
    budget = int(vmem_bytes * 0.6)                    # leave headroom (esp. v7x 64 MiB)
    per_bag = _block_vmem_bytes(1, n, d, h_dim, x_isz, out_isz)
    fixed = _fixed_vmem_bytes(d, h_dim, w_isz)
    avail = max(budget - fixed, per_bag)
    tb_vmem = max(1, avail // per_bag)
    tb_rows = max(1, 4096 // max(n, 1))               # target ~4096 MXU rows per step
    tb = int(min(batch, tb_rows, tb_vmem))
    tb = max(tb, 1)
    if num_tc > 1 and batch >= num_tc:
        # Only dual-TC chips (v7x) benefit from >= num_tc parallel grid blocks.
        tb = min(tb, -(-batch // num_tc))
    if tb >= batch:
        return batch
    # Output block is (tb, D): its sublane dim must be a multiple of 8 (or == batch).
    tb = max(8, (tb // 8) * 8)
    if tb >= batch:
        return batch
    # Prefer a tb that divides batch (no ragged tail) if it shrinks the block < 2x.
    div = next((c for c in range(tb, 7, -1) if batch % c == 0 and c % 8 == 0), None)
    if div is not None and div * 2 >= tb:
        return div
    return tb


@functools.partial(jax.jit, static_argnames=("block_b", "stream_dtype"))
def mil_attention(x, w1, b1, w2, b2, *, block_b=None, stream_dtype=None):
    batch, n, d = x.shape
    h_dim = w1.shape[1]
    out_dtype = x.dtype

    # Optionally stream x / W1 in a narrower dtype (bf16); accumulation, tanh and
    # softmax stay in f32 inside the kernel.
    if stream_dtype is not None:
        x = x.astype(stream_dtype)
        w1 = w1.astype(stream_dtype)

    vmem_bytes, num_tc = _tpu_vmem_and_cores()
    if block_b is None:
        block_b = _pick_block_b(batch, n, d, h_dim,
                                x.dtype.itemsize, out_dtype.itemsize,
                                w1.dtype.itemsize, vmem_bytes, num_tc)
    block_b = int(max(1, min(block_b, batch)))

    b1_row = b1.reshape(1, h_dim).astype(jnp.float32)   # (1, H)
    w2_col = w2.reshape(h_dim, 1).astype(jnp.float32)   # (H, 1)
    b2_s = b2.reshape(1, 1).astype(jnp.float32)          # scalar bias -> SMEM

    needed = (_block_vmem_bytes(block_b, n, d, h_dim,
                                x.dtype.itemsize, out_dtype.itemsize)
              + _fixed_vmem_bytes(d, h_dim, w1.dtype.itemsize))
    vmem_limit = int(min(vmem_bytes * 0.85, max(needed * 2 + (8 << 20), 32 << 20)))

    grid = (pl.cdiv(batch, block_b),)   # ragged tail (if any) handled by edge blocks

    out = pl.pallas_call(
        mil_attention_kernel,
        out_shape=jax.ShapeDtypeStruct((batch, d), out_dtype),
        grid=grid,
        in_specs=[
            pl.BlockSpec((block_b, n, d), lambda b: (b, 0, 0)),   # x: TB bags per step
            pl.BlockSpec((d, h_dim), lambda b: (0, 0)),           # W1 (resident)
            pl.BlockSpec((1, h_dim), lambda b: (0, 0)),           # b1
            pl.BlockSpec((h_dim, 1), lambda b: (0, 0)),           # w2 column
            pl.BlockSpec(memory_space=pltpu.MemorySpace.SMEM),    # b2 scalar in SMEM
        ],
        out_specs=pl.BlockSpec((block_b, d), lambda b: (b, 0)),
        compiler_params=pltpu.CompilerParams(
            dimension_semantics=("parallel",),
            vmem_limit_bytes=vmem_limit,
        ),
    )(x, w1, b1_row, w2_col, b2_s)
    return out


def mil_attention_ref(x, w1, b1, w2, b2):
    # Pure-JAX reference mirroring the PyTorch MILAttention.forward.
    h = jnp.tanh(jnp.einsum("bnd,dh->bnh", x, w1) + b1.reshape(1, 1, -1))   # (B, N, H)
    s = jnp.einsum("bnh,ho->bno", h, w2.reshape(-1, 1)) + b2.reshape(())    # (B, N, 1)
    a = jax.nn.softmax(jnp.swapaxes(s, 2, 1), axis=-1)                      # (B, 1, N)
    return jnp.einsum("bon,bnd->bod", a, x)[:, 0, :]                        # (B, D)


if __name__ == "__main__":
    # Small shapes consistent with ConceptNet's MILAttention(embed_dim, embed_dim // 2)
    # applied to ViT tokens: batch=8 bags, N=8 tokens, dim=32, hidden=16.
    B, N, D = 8, 8, 32
    H = D // 2

    key = jax.random.PRNGKey(0)
    kx, k1, kb1, k2, kb2 = jax.random.split(key, 5)

    x = jax.random.normal(kx, (B, N, D), dtype=jnp.float32)
    w1 = jax.random.normal(k1, (D, H), dtype=jnp.float32) * 0.1
    b1 = jax.random.normal(kb1, (1, H), dtype=jnp.float32) * 0.1
    w2 = jax.random.normal(k2, (H, 1), dtype=jnp.float32) * 0.1
    b2 = jax.random.normal(kb2, (1, 1), dtype=jnp.float32) * 0.1

    ref = mil_attention_ref(x, w1, b1, w2, b2)

    # f32-streamed path (tight tolerance; approx-reciprocal softmax normalization).
    out = jax.block_until_ready(mil_attention(x, w1, b1, w2, b2))
    assert out.shape == (B, D), out.shape
    assert jnp.allclose(out, ref, atol=2e-3, rtol=2e-3), float(jnp.max(jnp.abs(out - ref)))

    # bf16-streamed path (f32 accumulation / tanh / softmax in-kernel).
    out_bf16 = jax.block_until_ready(
        mil_attention(x, w1, b1, w2, b2, stream_dtype=jnp.bfloat16))
    assert out_bf16.shape == (B, D), out_bf16.shape
    assert jnp.allclose(out_bf16, ref, atol=5e-2, rtol=5e-2), float(
        jnp.max(jnp.abs(out_bf16 - ref)))

    print("KERNEL_OK")
</pallas_src>

<mosaic_0001>
module attributes {stable_mosaic.version = 11 : i64} {
  func.func @mil_attention_kernel(%arg0: i32, %arg1: memref<8x8x32xf32, #tpu.memory_space<vmem>>, %arg2: memref<32x16xf32, #tpu.memory_space<vmem>>, %arg3: memref<1x16xf32, #tpu.memory_space<vmem>>, %arg4: memref<16x1xf32, #tpu.memory_space<vmem>>, %arg5: memref<1x1xf32, #tpu.memory_space<smem>>, %arg6: memref<8x32xf32, #tpu.memory_space<vmem>>) attributes {dimension_semantics = [#tpu.dimension_semantics<parallel>], iteration_bounds = array<i64: 1>, scalar_prefetch = 0 : i64, scratch_operands = 0 : i64, tpu.core_type = #tpu.core_type<tc>, window_params = [{transform_indices = @transform_0, window_bounds = array<i64: 8, 8, 32>}, {pipeline_mode = #tpu.pipeline_mode<synchronous>, transform_indices = @transform_1, window_bounds = array<i64: 32, 16>}, {pipeline_mode = #tpu.pipeline_mode<synchronous>, transform_indices = @transform_2, window_bounds = array<i64: 1, 16>}, {pipeline_mode = #tpu.pipeline_mode<synchronous>, transform_indices = @transform_3, window_bounds = array<i64: 16, 1>}, {transform_indices = @transform_4, window_bounds = array<i64: 1, 1>}, {transform_indices = @transform_5, window_bounds = array<i64: 8, 32>}]} {
    %c0 = arith.constant 0 : index
    %c0_0 = arith.constant 0 : index
    %c0_1 = arith.constant 0 : index
    %0 = vector.load %arg1[%c0, %c0_0, %c0_1] : memref<8x8x32xf32, #tpu.memory_space<vmem>>, vector<8x8x32xf32>
    %1 = vector.shape_cast %0 : vector<8x8x32xf32> to vector<64x32xf32>
    %c0_2 = arith.constant 0 : index
    %c0_3 = arith.constant 0 : index
    %2 = vector.load %arg2[%c0_2, %c0_3] : memref<32x16xf32, #tpu.memory_space<vmem>>, vector<32x16xf32>
    %cst = arith.constant dense<0.000000e+00> : vector<64x16xf32>
    %3 = tpu.matmul %1, %2, %cst {dimension_numbers = #tpu.dot_dimension_numbers<[1], [0], [0], [1], [0, 0, 1, 1], [], []>} : vector<64x32xf32>, vector<32x16xf32>, vector<64x16xf32> -> vector<64x16xf32>
    %c0_4 = arith.constant 0 : index
    %c0_5 = arith.constant 0 : index
    %4 = vector.load %arg3[%c0_4, %c0_5] : memref<1x16xf32, #tpu.memory_space<vmem>>, vector<1x16xf32>
    %5 = vector.broadcast %4 : vector<1x16xf32> to vector<64x16xf32>
    %6 = arith.addf %3, %5 : vector<64x16xf32>
    %7 = math.tanh %6 : vector<64x16xf32>
    %c0_6 = arith.constant 0 : index
    %c0_7 = arith.constant 0 : index
    %8 = vector.load %arg4[%c0_6, %c0_7] : memref<16x1xf32, #tpu.memory_space<vmem>>, vector<16x1xf32>
    %cst_8 = arith.constant dense<0.000000e+00> : vector<64x1xf32>
    %9 = tpu.matmul %7, %8, %cst_8 {dimension_numbers = #tpu.dot_dimension_numbers<[1], [0], [0], [1], [0, 0, 1, 1], [], []>} : vector<64x16xf32>, vector<16x1xf32>, vector<64x1xf32> -> vector<64x1xf32>
    %c0_9 = arith.constant 0 : index
    %c0_10 = arith.constant 0 : index
    %10 = memref.load %arg5[%c0_9, %c0_10] : memref<1x1xf32, #tpu.memory_space<smem>>
    %11 = vector.broadcast %10 : f32 to vector<64x1xf32>
    %12 = arith.addf %9, %11 : vector<64x1xf32>
    %13 = vector.shape_cast %12 : vector<64x1xf32> to vector<8x8x1xf32>
    %cst_11 = arith.constant dense<0xFF800000> : vector<8x1xf32>
    %14 = vector.multi_reduction <maximumf>, %13, %cst_11 [1] : vector<8x8x1xf32> to vector<8x1xf32>
    %15 = vector.shape_cast %14 : vector<8x1xf32> to vector<8x1x1xf32>
    %16 = vector.broadcast %15 : vector<8x1x1xf32> to vector<8x8x1xf32>
    %17 = arith.subf %13, %16 : vector<8x8x1xf32>
    %18 = math.exp %17 : vector<8x8x1xf32>
    %cst_12 = arith.constant dense<0.000000e+00> : vector<8x1xf32>
    %19 = vector.multi_reduction <add>, %18, %cst_12 [1] : vector<8x8x1xf32> to vector<8x1xf32>
    %20 = vector.shape_cast %19 : vector<8x1xf32> to vector<8x1x1xf32>
    %21 = tpu.reciprocal %20 {approx = true} : vector<8x1x1xf32> -> vector<8x1x1xf32>
    %22 = vector.broadcast %21 : vector<8x1x1xf32> to vector<8x8x1xf32>
    %23 = arith.mulf %18, %22 : vector<8x8x1xf32>
    %24 = vector.broadcast %23 : vector<8x8x1xf32> to vector<8x8x32xf32>
    %25 = arith.mulf %24, %0 : vector<8x8x32xf32>
    %cst_13 = arith.constant dense<0.000000e+00> : vector<8x32xf32>
    %26 = vector.multi_reduction <add>, %25, %cst_13 [1] : vector<8x8x32xf32> to vector<8x32xf32>
    %c0_14 = arith.constant 0 : index
    %c0_15 = arith.constant 0 : index
    %27 = vector.load %arg6[%c0_14, %c0_15] : memref<8x32xf32, #tpu.memory_space<vmem>>, vector<8x32xf32>
    tpu.vector_store %arg6[%c0_14, %c0_15], %26 {strides = array<i32>} : memref<8x32xf32, #tpu.memory_space<vmem>>, vector<8x32xf32>,
    return
  }
  func.func @transform_0(%arg0: i32) -> (i32, i32, i32) {
    %c0_i32 = arith.constant 0 : i32
    %c0_i32_0 = arith.constant 0 : i32
    %c0_i32_1 = arith.constant 0 : i32
    return %arg0, %c0_i32, %c0_i32_0 : i32, i32, i32
  }
  func.func @transform_1(%arg0: i32) -> (i32, i32) {
    %c0_i32 = arith.constant 0 : i32
    %c0_i32_0 = arith.constant 0 : i32
    %c0_i32_1 = arith.constant 0 : i32
    return %c0_i32, %c0_i32_0 : i32, i32
  }
  func.func @transform_2(%arg0: i32) -> (i32, i32) {
    %c0_i32 = arith.constant 0 : i32
    %c0_i32_0 = arith.constant 0 : i32
    %c0_i32_1 = arith.constant 0 : i32
    return %c0_i32, %c0_i32_0 : i32, i32
  }
  func.func @transform_3(%arg0: i32) -> (i32, i32) {
    %c0_i32 = arith.constant 0 : i32
    %c0_i32_0 = arith.constant 0 : i32
    %c0_i32_1 = arith.constant 0 : i32
    return %c0_i32, %c0_i32_0 : i32, i32
  }
  func.func @transform_4(%arg0: i32) -> (i32, i32) {
    %c0_i32 = arith.constant 0 : i32
    %c0_i32_0 = arith.constant 0 : i32
    %c0_i32_1 = arith.constant 0 : i32
    return %c0_i32, %c0_i32_0 : i32, i32
  }
  func.func @transform_5(%arg0: i32) -> (i32, i32) {
    %c0_i32 = arith.constant 0 : i32
    %c0_i32_0 = arith.constant 0 : i32
    return %arg0, %c0_i32 : i32, i32
  }
}

</mosaic_0001>

<llo_original>
// kernel: mil_attention.1
$region0: #{mil_attention.1}
  #allocation0 [shape = 'u32[]', space=smem, size = 0x4, offset = 0x4, fixed_abs, tag = 'smem constant byte address 0x4 - core index']
  #allocation1 [shape = 'u32[144,128]{1,0:T(1,128)}', space=vmem, size = 0x12000, scoped, tag = 'internal scratch']
  #allocation2 [shape = 'f32[1,1]{1,0:T(1,128)S(6)}', space=smem, size = 0x200, scoped, tag = 'scoped memory for mil_attention.1']
  %s0 = inlined_call_operand.vmem [shape: f32[8,8,32], index: 0, kind: input, shape index: {}]
  %s1 = inlined_call_operand.vmem [shape: f32[32,16], index: 1, kind: input, shape index: {}]
  %s2 = inlined_call_operand.vmem [shape: f32[1,16], index: 2, kind: input, shape index: {}]
  %s3 = inlined_call_operand.vmem [shape: f32[16,1], index: 3, kind: input, shape index: {}]
  %s4 = inlined_call_operand.<no memory space> [shape: f32[1,1], index: 4, kind: input, shape index: {}]
  %s5 = inlined_call_operand.hbm [shape: f32[8,32], index: 5, kind: output, shape index: {}]
  %s6 = sld [smem:[#allocation0]]
  $region30: #{mil_attention.1} parent=0
    _
  %s8 = ssub.s32 1, %s6
  %s9 = scalar_select 0, %s8, %s6
  %10 = sst [smem:[#allocation2]] %s4
  $region1: #{mil_attention.1} parent=0
    #allocation3 [shape = 'u8[4096]{0}', space=vmem, size = 0x1000, scoped, tag = 'output window, operand 0, single buffered']
    #allocation4 [shape = 's32[1]{0}', space=sflag, size = 0x4, scoped, tag = 'scoped memory for mil_attention.1']
    %11 = vsyncpa [#allocation4], 0
    // Predicated region
    $region2: #{mil_attention.1} parent=1 // pred_check
      _
    $region3: #{mil_attention.1} parent=1 // pred_check_branch
      %13 = sbr.rel (0) target = $region5
    $region4: #{mil_attention.1} parent=1 // pred_region
      _
    $region5: #{mil_attention.1} parent=1 // pred_fallthru
      _
    // Predicated region
    $region6: #{mil_attention.1} parent=1 // pred_check
      _
    $region7: #{mil_attention.1} parent=1 // pred_check_branch
      %15 = sbr.rel (0) target = $region9
    $region8: #{mil_attention.1} parent=1 // pred_region
      _
    $region9: #{mil_attention.1} parent=1 // pred_fallthru
      _
    // Predicated region
    $region10: #{mil_attention.1} parent=1 // pred_check
      _
    $region11: #{mil_attention.1} parent=1 // pred_check_branch
      %17 = sbr.rel (0) target = $region13
    $region12: #{mil_attention.1} parent=1 // pred_region
      _
    $region13: #{mil_attention.1} parent=1 // pred_fallthru
      _
    // Predicated region
    $region14: #{mil_attention.1} parent=1 // pred_check
      _
    $region15: #{mil_attention.1} parent=1 // pred_check_branch
      %19 = sbr.rel (0) target = $region17
    $region16: #{mil_attention.1} parent=1 // pred_region
      _
    $region17: #{mil_attention.1} parent=1 // pred_fallthru
      _
    // Predicated region
    $region18: #{mil_attention.1} parent=1 // pred_check
      _
    $region19: #{mil_attention.1} parent=1 // pred_check_branch
      %21 = sbr.rel (0) target = $region21
    $region20: #{mil_attention.1} parent=1 // pred_region
      _
    $region21: #{mil_attention.1} parent=1 // pred_fallthru
      _
    %v22 = vld [vmem:[%s0] sm:$0xff]
    %v23 = vld [vmem:[%s0 + $0x8] sm:$0xff]
    %v24 = vld [vmem:[%s0 + $0x10] sm:$0xff]
    %v25 = vld [vmem:[%s0 + $0x18] sm:$0xff]
    %v26 = vld [vmem:[%s0 + $0x20] sm:$0xff]
    %v27 = vld [vmem:[%s0 + $0x28] sm:$0xff]
    %v28 = vld [vmem:[%s0 + $0x30] sm:$0xff]
    %v29 = vld [vmem:[%s0 + $0x38] sm:$0xff]
    %v30 = vld [vmem:[%s1] sm:$0xff]
    %v31 = vld [vmem:[%s1 + $0x8] sm:$0xff]
    %v32 = vld [vmem:[%s1 + $0x10] sm:$0xff]
    %v33 = vld [vmem:[%s1 + $0x18] sm:$0xff]
    %v34 = vld [vmem:[%s2] sm:$0x1]
    %v36 = vlaneseq
    %v37 = vshrl.u32 %v36, 7
    %v38 = vsub.s32 0, %v37
    %v39 = vrot.slane %v34, %v38
    %vm41 = vcmask 261120
    %v43 = vsel %vm41, %v22, 0
    %v46 = vsel %vm41, %v23, 0
    %v49 = vsel %vm41, %v24, 0
    %v52 = vsel %vm41, %v25, 0
    %v55 = vsel %vm41, %v26, 0
    %v58 = vsel %vm41, %v27, 0
    %v61 = vsel %vm41, %v28, 0
    %v64 = vsel %vm41, %v29, 0
    %66 = vmatprep.subr.mxu0 0.0
    %67 = vmatpush1.msra.mxu0 %v30
    %68 = vmatprep.subr.mxu0 0.0
    %69 = vmatpush1.msra.mxu0 %v31
    %70 = vmatprep.subr.mxu0 0.0
    %71 = vmatpush1.msra.mxu0 %v32
    %72 = vmatprep.subr.mxu0 0.0
    %73 = vmatpush1.msra.mxu0 %v33
    %74 = vmatprep.subr.mxu0 0.0
    %75 = vmatpush1.msra.mxu0 0.0
    %76 = vmatprep.subr.mxu0 0.0
    %77 = vmatpush1.msra.mxu0 0.0
    %78 = vmatprep.subr.mxu0 0.0
    %79 = vmatpush1.msra.mxu0 0.0
    %80 = vmatprep.subr.mxu0 0.0
    %81 = vmatpush1.msra.mxu0 0.0
    %82 = vmatprep.subr.mxu0 0.0
    %83 = vmatpush1.msra.mxu0 0.0
    %84 = vmatprep.subr.mxu0 0.0
    %85 = vmatpush1.msra.mxu0 0.0
    %86 = vmatprep.subr.mxu0 0.0
    %87 = vmatpush1.msra.mxu0 0.0
    %88 = vmatprep.subr.mxu0 0.0
    %89 = vmatpush1.msra.mxu0 0.0
    %90 = vmatprep.subr.mxu0 0.0
    %91 = vmatpush1.msra.mxu0 0.0
    %92 = vmatprep.subr.mxu0 0.0
    %93 = vmatpush1.msra.mxu0 0.0
    %94 = vmatprep.subr.mxu0 0.0
    %95 = vmatpush1.msra.mxu0 0.0
    %96 = vmatprep.subr.mxu0 0.0
    %97 = vmatpush1.msra.mxu0 0.0
    %98 = vmatprep.subr.mxu0 0.0
    %99 = vmatpush1.msra.mxu0 0.0
    %100 = vmatprep.subr.mxu0 0.0
    %101 = vmatpush1.msra.mxu0 0.0
    %102 = vmatprep.subr.mxu0 0.0
    %103 = vmatpush1.msra.mxu0 0.0
    %104 = vmatprep.subr.mxu0 0.0
    %105 = vmatpush1.msra.mxu0 0.0
    %106 = vmatprep.subr.mxu0 0.0
    %107 = vmatpush1.msra.mxu0 0.0
    %108 = vmatprep.subr.mxu0 0.0
    %109 = vmatpush1.msra.mxu0 0.0
    %110 = vmatprep.subr.mxu0 0.0
    %111 = vmatpush1.msra.mxu0 0.0
    %112 = vmatprep.subr.mxu0 0.0
    %113 = vmatpush1.msra.mxu0 0.0
    %114 = vmatprep.subr.mxu0 0.0
    %115 = vmatpush1.msra.mxu0 0.0
    %116 = vmatprep.subr.mxu0 0.0
    %117 = vmatpush1.msra.mxu0 0.0
    %118 = vmatprep.subr.mxu0 0.0
    %119 = vmatpush1.msra.mxu0 0.0
    %120 = vmatprep.subr.mxu0 0.0
    %121 = vmatpush1.msra.mxu0 0.0
    %122 = vmatprep.subr.mxu0 0.0
    %123 = vmatpush1.msra.mxu0 0.0
    %124 = vmatprep.subr.mxu0 0.0
    %125 = vmatpush1.msra.mxu0 0.0
    %126 = vmatprep.subr.mxu0 0.0
    %127 = vmatpush1.msra.mxu0 0.0
    %128 = vmatprep.subr.mxu0 0.0
    %129 = vmatpush1.msra.mxu0 0.0
    %130 = vmatprep.mubr.f32.mxu0 0.0
    %131 = vmatmul.mubr.f32.gmra.mrb[0].mxu0 %v43
    %v132 = vpop.f32.mrb[0].mxu0
    %v133 = vadd.f32 %v39, %v132
    %v134 = vpop.f32.mrb[0].mxu0
    %135 = vmatprep.mubr.f32.mxu0 0.0
    %136 = vmatmul.mubr.f32.gmra.mrb[0].mxu0 %v46
    %v137 = vpop.f32.mrb[0].mxu0
    %v138 = vadd.f32 %v39, %v137
    %v139 = vpop.f32.mrb[0].mxu0
    %140 = vmatprep.mubr.f32.mxu0 0.0
    %141 = vmatmul.mubr.f32.gmra.mrb[0].mxu0 %v49
    %v142 = vpop.f32.mrb[0].mxu0
    %v143 = vadd.f32 %v39, %v142
    %v144 = vpop.f32.mrb[0].mxu0
    %145 = vmatprep.mubr.f32.mxu0 0.0
    %146 = vmatmul.mubr.f32.gmra.mrb[0].mxu0 %v52
    %v147 = vpop.f32.mrb[0].mxu0
    %v148 = vadd.f32 %v39, %v147
    %v149 = vpop.f32.mrb[0].mxu0
    %150 = vmatprep.mubr.f32.mxu0 0.0
    %151 = vmatmul.mubr.f32.gmra.mrb[0].mxu0 %v55
    %v152 = vpop.f32.mrb[0].mxu0
    %v153 = vadd.f32 %v39, %v152
    %v154 = vpop.f32.mrb[0].mxu0
    %155 = vmatprep.mubr.f32.mxu0 0.0
    %156 = vmatmul.mubr.f32.gmra.mrb[0].mxu0 %v58
    %v157 = vpop.f32.mrb[0].mxu0
    %v158 = vadd.f32 %v39, %v157
    %v159 = vpop.f32.mrb[0].mxu0
    %160 = vmatprep.mubr.f32.mxu0 0.0
    %161 = vmatmul.mubr.f32.gmra.mrb[0].mxu0 %v61
    %v162 = vpop.f32.mrb[0].mxu0
    %v163 = vadd.f32 %v39, %v162
    %v164 = vpop.f32.mrb[0].mxu0
    %165 = vmatprep.mubr.f32.mxu0 0.0
    %166 = vmatmul.mubr.f32.gmra.mrb[0].mxu0 %v64
    %v167 = vpop.f32.mrb[0].mxu0
    %v168 = vadd.f32 %v39, %v167
    %v169 = vpop.f32.mrb[0].mxu0
    %170 = vdwg.mxu0
    %v171 = vtanh.pop %v133
    %v172 = vtanh.pop %v138
    %v173 = vtanh.pop %v143
    %v174 = vtanh.pop %v148
    %v175 = vtanh.pop %v153
    %v176 = vtanh.pop %v158
    %v177 = vtanh.pop %v163
    %v178 = vtanh.pop %v168
    %v179 = vld [vmem:[%s3] sm:$0xff]
    %v180 = vld [vmem:[%s3 + $0x8] sm:$0xff]
    %s181 = sld [smem:[#allocation2]]
    %v182 = vstv %s181
    %vm183 = vcmask 130048
    %v185 = vsel %vm183, %v171, 0
    %v188 = vsel %vm183, %v172, 0
    %v191 = vsel %vm183, %v173, 0
    %v194 = vsel %vm183, %v174, 0
    %v197 = vsel %vm183, %v175, 0
    %v200 = vsel %vm183, %v176, 0
    %v203 = vsel %vm183, %v177, 0
    %v206 = vsel %vm183, %v178, 0
    %208 = vmatprep.subr.mxu0 0.0
    %209 = vmatpush1.msra.mxu0 %v179
    %210 = vmatprep.subr.mxu0 0.0
    %211 = vmatpush1.msra.mxu0 %v180
    %212 = vmatprep.subr.mxu0 0.0
    %213 = vmatpush1.msra.mxu0 0.0
    %214 = vmatprep.subr.mxu0 0.0
    %215 = vmatpush1.msra.mxu0 0.0
    %216 = vmatprep.subr.mxu0 0.0
    %217 = vmatpush1.msra.mxu0 0.0
    %218 = vmatprep.subr.mxu0 0.0
    %219 = vmatpush1.msra.mxu0 0.0
    %220 = vmatprep.subr.mxu0 0.0
    %221 = vmatpush1.msra.mxu0 0.0
    %222 = vmatprep.subr.mxu0 0.0
    %223 = vmatpush1.msra.mxu0 0.0
    %224 = vmatprep.subr.mxu0 0.0
    %225 = vmatpush1.msra.mxu0 0.0
    %226 = vmatprep.subr.mxu0 0.0
    %227 = vmatpush1.msra.mxu0 0.0
    %228 = vmatprep.subr.mxu0 0.0
    %229 = vmatpush1.msra.mxu0 0.0
    %230 = vmatprep.subr.mxu0 0.0
    %231 = vmatpush1.msra.mxu0 0.0
    %232 = vmatprep.subr.mxu0 0.0
    %233 = vmatpush1.msra.mxu0 0.0
    %234 = vmatprep.subr.mxu0 0.0
    %235 = vmatpush1.msra.mxu0 0.0
    %236 = vmatprep.subr.mxu0 0.0
    %237 = vmatpush1.msra.mxu0 0.0
    %238 = vmatprep.subr.mxu0 0.0
    %239 = vmatpush1.msra.mxu0 0.0
    %240 = vmatprep.subr.mxu0 0.0
    %241 = vmatpush1.msra.mxu0 0.0
    %242 = vmatprep.subr.mxu0 0.0
    %243 = vmatpush1.msra.mxu0 0.0
    %244 = vmatprep.subr.mxu0 0.0
    %245 = vmatpush1.msra.mxu0 0.0
    %246 = vmatprep.subr.mxu0 0.0
    %247 = vmatpush1.msra.mxu0 0.0
    %248 = vmatprep.subr.mxu0 0.0
    %249 = vmatpush1.msra.mxu0 0.0
    %250 = vmatprep.subr.mxu0 0.0
    %251 = vmatpush1.msra.mxu0 0.0
    %252 = vmatprep.subr.mxu0 0.0
    %253 = vmatpush1.msra.mxu0 0.0
    %254 = vmatprep.subr.mxu0 0.0
    %255 = vmatpush1.msra.mxu0 0.0
    %256 = vmatprep.subr.mxu0 0.0
    %257 = vmatpush1.msra.mxu0 0.0
    %258 = vmatprep.subr.mxu0 0.0
    %259 = vmatpush1.msra.mxu0 0.0
    %260 = vmatprep.subr.mxu0 0.0
    %261 = vmatpush1.msra.mxu0 0.0
    %262 = vmatprep.subr.mxu0 0.0
    %263 = vmatpush1.msra.mxu0 0.0
    %264 = vmatprep.subr.mxu0 0.0
    %265 = vmatpush1.msra.mxu0 0.0
    %266 = vmatprep.subr.mxu0 0.0
    %267 = vmatpush1.msra.mxu0 0.0
    %268 = vmatprep.subr.mxu0 0.0
    %269 = vmatpush1.msra.mxu0 0.0
    %270 = vmatprep.subr.mxu0 0.0
    %271 = vmatpush1.msra.mxu0 0.0
    %272 = vmatprep.mubr.f32.mxu0 0.0
    %273 = vmatmul.mubr.f32.gmra.mrb[0].mxu0 %v185
    %v274 = vpop.f32.mrb[0].mxu0
    %v275 = vadd.f32 %v182, %v274
    %v276 = vpop.f32.mrb[0].mxu0
    %277 = vmatprep.mubr.f32.mxu0 0.0
    %278 = vmatmul.mubr.f32.gmra.mrb[0].mxu0 %v188
    %v279 = vpop.f32.mrb[0].mxu0
    %v280 = vadd.f32 %v182, %v279
    %v281 = vpop.f32.mrb[0].mxu0
    %282 = vmatprep.mubr.f32.mxu0 0.0
    %283 = vmatmul.mubr.f32.gmra.mrb[0].mxu0 %v191
    %v284 = vpop.f32.mrb[0].mxu0
    %v285 = vadd.f32 %v182, %v284
    %v286 = vpop.f32.mrb[0].mxu0
    %287 = vmatprep.mubr.f32.mxu0 0.0
    %288 = vmatmul.mubr.f32.gmra.mrb[0].mxu0 %v194
    %v289 = vpop.f32.mrb[0].mxu0
    %v290 = vadd.f32 %v182, %v289
    %v291 = vpop.f32.mrb[0].mxu0
    %292 = vmatprep.mubr.f32.mxu0 0.0
    %293 = vmatmul.mubr.f32.gmra.mrb[0].mxu0 %v197
    %v294 = vpop.f32.mrb[0].mxu0
    %v295 = vadd.f32 %v182, %v294
    %v296 = vpop.f32.mrb[0].mxu0
    %297 = vmatprep.mubr.f32.mxu0 0.0
    %298 = vmatmul.mubr.f32.gmra.mrb[0].mxu0 %v200
    %v299 = vpop.f32.mrb[0].mxu0
    %v300 = vadd.f32 %v182, %v299
    %v301 = vpop.f32.mrb[0].mxu0
    %302 = vmatprep.mubr.f32.mxu0 0.0
    %303 = vmatmul.mubr.f32.gmra.mrb[0].mxu0 %v203
    %v304 = vpop.f32.mrb[0].mxu0
    %v305 = vadd.f32 %v182, %v304
    %v306 = vpop.f32.mrb[0].mxu0
    %307 = vmatprep.mubr.f32.mxu0 0.0
    %308 = vmatmul.mubr.f32.gmra.mrb[0].mxu0 %v206
    %v309 = vpop.f32.mrb[0].mxu0
    %v310 = vadd.f32 %v182, %v309
    %v311 = vpop.f32.mrb[0].mxu0
    %312 = vdwg.mxu0
    %vm313 = vcmask 7168
    %v314 = vsel %vm313, %v275, -inf
    %v315 = vrot.slane %v314, 4
    %v316 = vmax.f32 %v314, %v315
    %v317 = vrot.slane %v316, 2
    %v318 = vmax.f32 %v316, %v317
    %v319 = vrot.slane %v318, 1
    %v320 = vmax.f32 %v318, %v319
    %v321 = vsel %vm313, %v280, -inf
    %v322 = vrot.slane %v321, 4
    %v323 = vmax.f32 %v321, %v322
    %v324 = vrot.slane %v323, 2
    %v325 = vmax.f32 %v323, %v324
    %v326 = vrot.slane %v325, 1
    %v327 = vmax.f32 %v325, %v326
    %v328 = vsel %vm313, %v285, -inf
    %v329 = vrot.slane %v328, 4
    %v330 = vmax.f32 %v328, %v329
    %v331 = vrot.slane %v330, 2
    %v332 = vmax.f32 %v330, %v331
    %v333 = vrot.slane %v332, 1
    %v334 = vmax.f32 %v332, %v333
    %v335 = vsel %vm313, %v290, -inf
    %v336 = vrot.slane %v335, 4
    %v337 = vmax.f32 %v335, %v336
    %v338 = vrot.slane %v337, 2
    %v339 = vmax.f32 %v337, %v338
    %v340 = vrot.slane %v339, 1
    %v341 = vmax.f32 %v339, %v340
    %v342 = vsel %vm313, %v295, -inf
    %v343 = vrot.slane %v342, 4
    %v344 = vmax.f32 %v342, %v343
    %v345 = vrot.slane %v344, 2
    %v346 = vmax.f32 %v344, %v345
    %v347 = vrot.slane %v346, 1
    %v348 = vmax.f32 %v346, %v347
    %v349 = vsel %vm313, %v300, -inf
    %v350 = vrot.slane %v349, 4
    %v351 = vmax.f32 %v349, %v350
    %v352 = vrot.slane %v351, 2
    %v353 = vmax.f32 %v351, %v352
    %v354 = vrot.slane %v353, 1
    %v355 = vmax.f32 %v353, %v354
    %v356 = vsel %vm313, %v305, -inf
    %v357 = vrot.slane %v356, 4
    %v358 = vmax.f32 %v356, %v357
    %v359 = vrot.slane %v358, 2
    %v360 = vmax.f32 %v358, %v359
    %v361 = vrot.slane %v360, 1
    %v362 = vmax.f32 %v360, %v361
    %v363 = vsel %vm313, %v310, -inf
    %v364 = vrot.slane %v363, 4
    %v365 = vmax.f32 %v363, %v364
    %v366 = vrot.slane %v365, 2
    %v367 = vmax.f32 %v365, %v366
    %v368 = vrot.slane %v367, 1
    %v369 = vmax.f32 %v367, %v368
    %v370 = vsub.f32 %v275, %v320
    %v371 = vsub.f32 %v280, %v327
    %v372 = vsub.f32 %v285, %v334
    %v373 = vsub.f32 %v290, %v341
    %v374 = vsub.f32 %v295, %v348
    %v375 = vsub.f32 %v300, %v355
    %v376 = vsub.f32 %v305, %v362
    %v377 = vsub.f32 %v310, %v369
    %v378 = vmul.f32 %v370, 1.442695
    %v379 = vpow.pop %v378
    %v380 = vmul.f32 %v371, 1.442695
    %v381 = vpow.pop %v380
    %v382 = vmul.f32 %v372, 1.442695
    %v383 = vpow.pop %v382
    %v384 = vmul.f32 %v373, 1.442695
    %v385 = vpow.pop %v384
    %v386 = vmul.f32 %v374, 1.442695
    %v387 = vpow.pop %v386
    %v388 = vmul.f32 %v375, 1.442695
    %v389 = vpow.pop %v388
    %v390 = vmul.f32 %v376, 1.442695
    %v391 = vpow.pop %v390
    %v392 = vmul.f32 %v377, 1.442695
    %v393 = vpow.pop %v392
    %v394 = vsel %vm313, %v379, 0.0
    %v395 = vrot.slane %v394, 4
    %v396 = vadd.f32 %v394, %v395
    %v397 = vrot.slane %v396, 2
    %v398 = vadd.f32 %v396, %v397
    %v399 = vrot.slane %v398, 1
    %v400 = vadd.f32 %v398, %v399
    %v401 = vsel %vm313, %v381, 0.0
    %v402 = vrot.slane %v401, 4
    %v403 = vadd.f32 %v401, %v402
    %v404 = vrot.slane %v403, 2
    %v405 = vadd.f32 %v403, %v404
    %v406 = vrot.slane %v405, 1
    %v407 = vadd.f32 %v405, %v406
    %v408 = vsel %vm313, %v383, 0.0
    %v409 = vrot.slane %v408, 4
    %v410 = vadd.f32 %v408, %v409
    %v411 = vrot.slane %v410, 2
    %v412 = vadd.f32 %v410, %v411
    %v413 = vrot.slane %v412, 1
    %v414 = vadd.f32 %v412, %v413
    %v415 = vsel %vm313, %v385, 0.0
    %v416 = vrot.slane %v415, 4
    %v417 = vadd.f32 %v415, %v416
    %v418 = vrot.slane %v417, 2
    %v419 = vadd.f32 %v417, %v418
    %v420 = vrot.slane %v419, 1
    %v421 = vadd.f32 %v419, %v420
    %v422 = vsel %vm313, %v387, 0.0
    %v423 = vrot.slane %v422, 4
    %v424 = vadd.f32 %v422, %v423
    %v425 = vrot.slane %v424, 2
    %v426 = vadd.f32 %v424, %v425
    %v427 = vrot.slane %v426, 1
    %v428 = vadd.f32 %v426, %v427
    %v429 = vsel %vm313, %v389, 0.0
    %v430 = vrot.slane %v429, 4
    %v431 = vadd.f32 %v429, %v430
    %v432 = vrot.slane %v431, 2
    %v433 = vadd.f32 %v431, %v432
    %v434 = vrot.slane %v433, 1
    %v435 = vadd.f32 %v433, %v434
    %v436 = vsel %vm313, %v391, 0.0
    %v437 = vrot.slane %v436, 4
    %v438 = vadd.f32 %v436, %v437
    %v439 = vrot.slane %v438, 2
    %v440 = vadd.f32 %v438, %v439
    %v441 = vrot.slane %v440, 1
    %v442 = vadd.f32 %v440, %v441
    %v443 = vsel %vm313, %v393, 0.0
    %v444 = vrot.slane %v443, 4
    %v445 = vadd.f32 %v443, %v444
    %v446 = vrot.slane %v445, 2
    %v447 = vadd.f32 %v445, %v446
    %v448 = vrot.slane %v447, 1
    %v449 = vadd.f32 %v447, %v448
    %v450 = vrcp.pop %v400
    %v451 = vrcp.pop %v407
    %v452 = vrcp.pop %v414
    %v453 = vrcp.pop %v421
    %v454 = vrcp.pop %v428
    %v455 = vrcp.pop %v435
    %v456 = vrcp.pop %v442
    %v457 = vrcp.pop %v449
    %v458 = vmul.f32 %v379, %v450
    %v459 = vmul.f32 %v381, %v451
    %v460 = vmul.f32 %v383, %v452
    %v461 = vmul.f32 %v385, %v453
    %v462 = vmul.f32 %v387, %v454
    %v463 = vmul.f32 %v389, %v455
    %v464 = vmul.f32 %v391, %v456
    %v465 = vmul.f32 %v393, %v457
    %467 = vset.pattern.permute.xlu0 0
    %468 = vperm.xlu0 %467, %v458
    %v469 = vpop.permute.xlu0 %468
    %472 = vset.pattern.permute.xlu0 0
    %473 = vperm.xlu0 %472, %v459
    %v474 = vpop.permute.xlu0 %473
    %477 = vset.pattern.permute.xlu0 0
    %478 = vperm.xlu0 %477, %v460
    %v479 = vpop.permute.xlu0 %478
    %482 = vset.pattern.permute.xlu0 0
    %483 = vperm.xlu0 %482, %v461
    %v484 = vpop.permute.xlu0 %483
    %487 = vset.pattern.permute.xlu0 0
    %488 = vperm.xlu0 %487, %v462
    %v489 = vpop.permute.xlu0 %488
    %492 = vset.pattern.permute.xlu0 0
    %493 = vperm.xlu0 %492, %v463
    %v494 = vpop.permute.xlu0 %493
    %497 = vset.pattern.permute.xlu0 0
    %498 = vperm.xlu0 %497, %v464
    %v499 = vpop.permute.xlu0 %498
    %502 = vset.pattern.permute.xlu0 0
    %503 = vperm.xlu0 %502, %v465
    %v504 = vpop.permute.xlu0 %503
    %v506 = vmul.f32 %v469, %v22
    %v507 = vmul.f32 %v474, %v23
    %v508 = vmul.f32 %v479, %v24
    %v509 = vmul.f32 %v484, %v25
    %v510 = vmul.f32 %v489, %v26
    %v511 = vmul.f32 %v494, %v27
    %v512 = vmul.f32 %v499, %v28
    %v513 = vmul.f32 %v504, %v29
    %v514 = vsel %vm41, %v506, 0.0
    %v515 = vrot.slane %v514, 4
    %v516 = vadd.f32 %v514, %v515
    %v517 = vrot.slane %v516, 2
    %v518 = vadd.f32 %v516, %v517
    %v519 = vrot.slane %v518, 1
    %v520 = vadd.f32 %v518, %v519
    %v521 = vsel %vm41, %v507, 0.0
    %v522 = vrot.slane %v521, 4
    %v523 = vadd.f32 %v521, %v522
    %v524 = vrot.slane %v523, 2
    %v525 = vadd.f32 %v523, %v524
    %v526 = vrot.slane %v525, 1
    %v527 = vadd.f32 %v525, %v526
    %v528 = vsel %vm41, %v508, 0.0
    %v529 = vrot.slane %v528, 4
    %v530 = vadd.f32 %v528, %v529
    %v531 = vrot.slane %v530, 2
    %v532 = vadd.f32 %v530, %v531
    %v533 = vrot.slane %v532, 1
    %v534 = vadd.f32 %v532, %v533
    %v535 = vsel %vm41, %v509, 0.0
    %v536 = vrot.slane %v535, 4
    %v537 = vadd.f32 %v535, %v536
    %v538 = vrot.slane %v537, 2
    %v539 = vadd.f32 %v537, %v538
    %v540 = vrot.slane %v539, 1
    %v541 = vadd.f32 %v539, %v540
    %v542 = vsel %vm41, %v510, 0.0
    %v543 = vrot.slane %v542, 4
    %v544 = vadd.f32 %v542, %v543
    %v545 = vrot.slane %v544, 2
    %v546 = vadd.f32 %v544, %v545
    %v547 = vrot.slane %v546, 1
    %v548 = vadd.f32 %v546, %v547
    %v549 = vsel %vm41, %v511, 0.0
    %v550 = vrot.slane %v549, 4
    %v551 = vadd.f32 %v549, %v550
    %v552 = vrot.slane %v551, 2
    %v553 = vadd.f32 %v551, %v552
    %v554 = vrot.slane %v553, 1
    %v555 = vadd.f32 %v553, %v554
    %v556 = vsel %vm41, %v512, 0.0
    %v557 = vrot.slane %v556, 4
    %v558 = vadd.f32 %v556, %v557
    %v559 = vrot.slane %v558, 2
    %v560 = vadd.f32 %v558, %v559
    %v561 = vrot.slane %v560, 1
    %v562 = vadd.f32 %v560, %v561
    %v563 = vsel %vm41, %v513, 0.0
    %v564 = vrot.slane %v563, 4
    %v565 = vadd.f32 %v563, %v564
    %v566 = vrot.slane %v565, 2
    %v567 = vadd.f32 %v565, %v566
    %v568 = vrot.slane %v567, 1
    %v569 = vadd.f32 %v567, %v568
    %vm578 = vcmask 1041409
    %v579 = vsel %vm578, %v527, %v520
    %vm580 = vcmask 1042434
    %v581 = vsel %vm580, %v534, %v579
    %vm582 = vcmask 1043459
    %v583 = vsel %vm582, %v541, %v581
    %vm584 = vcmask 1044484
    %v585 = vsel %vm584, %v548, %v583
    %vm586 = vcmask 1045509
    %v587 = vsel %vm586, %v555, %v585
    %vm588 = vcmask 1046534
    %v589 = vsel %vm588, %v562, %v587
    %vm590 = vcmask 1047559
    %v591 = vsel %vm590, %v569, %v589
    %593 = vst.msk [vmem:[#allocation3] sm:$0xff] %vm41, %v591
    // Predicated region
    $region22: #{mil_attention.1} parent=1 // pred_check
      _
    $region23: #{mil_attention.1} parent=1 // pred_check_branch
      %595 = sbr.rel (0) target = $region25
    $region24: #{mil_attention.1} parent=1 // pred_region
      %s597 = ssub.s32 128, 128
      %598 = vsyncadd [#allocation4], %s597
      %s600 = sshll.u32 [#allocation3], 4
      %s601 = int_to_ptr.vmem [resolvable:$true] %s600
      %603 = dma.vmem_to_hbm [thread:$0]  %s601, 128, %s5, [#allocation4]
    $region25: #{mil_attention.1} parent=1 // pred_fallthru
      _
    // Predicated region
    $region26: #{mil_attention.1} parent=1 // pred_check
      _
    $region27: #{mil_attention.1} parent=1 // pred_check_branch
      %605 = sbr.rel (0) target = $region29
    $region28: #{mil_attention.1} parent=1 // pred_region
      %606 = dma.done [#allocation4], 128
    $region29: #{mil_attention.1} parent=1 // pred_fallthru
      _
    %607 = vsyncpa [#allocation4], 1

</llo_original>
